<compile_context>
chip_gen: v6e
topology: v6e:2x2x1
jax: 0.10.0
libtpu: 0.0.40
codegen_flags: <defaults>
</compile_context>

<pallas_src>
import math
import functools

import jax
import jax.numpy as jnp
from jax import lax
from jax.experimental import pallas as pl
from jax.experimental.pallas import tpu as pltpu


def _round_up(a: int, b: int) -> int:
    return (a + b - 1) // b * b


def masked_linear_kernel(x_ref, w_ref, m_ref, b_ref, o_ref, acc_ref):
    k = pl.program_id(2)

    @pl.when(k == 0)
    def _():
        acc_ref[...] = jnp.zeros_like(acc_ref)

    # Mask multiply on the VPU (int8 mask cast to the compute dtype),
    # matmul on the MXU contracting the last axes of both tiles -> no .T.
    w = w_ref[...] * m_ref[...].astype(w_ref.dtype)          # (tn, tk)
    acc_ref[...] += lax.dot_general(
        x_ref[...], w,                                        # (tm, tk) x (tn, tk)
        dimension_numbers=(((1,), (1,)), ((), ())),
        preferred_element_type=jnp.float32,                   # f32 accumulation
    )                                                         # -> (tm, tn)

    @pl.when(k == pl.num_programs(2) - 1)
    def _():
        o_ref[...] = (acc_ref[...] + b_ref[...]).astype(o_ref.dtype)


@functools.partial(jax.jit, static_argnames=("compute_dtype",))
def masked_linear(x, weight, mask, bias, *, compute_dtype=None):
    """out = x @ (weight * mask).T + bias   (PyTorch F.linear semantics).

    x:      (B, in_features)
    weight: (out_features, in_features)
    mask:   (out_features, in_features)   (0/1 values)
    bias:   (out_features,)
    """
    B, in_f = x.shape
    out_f, _ = weight.shape
    out_dtype = x.dtype
    cdt = jnp.dtype(compute_dtype) if compute_dtype is not None else x.dtype

    # Tile sizes: lane-dense (multiple of 128) N/K, sublane-friendly M,
    # sized so streamed, double-buffered tiles stay far below v7x's 64 MiB VMEM.
    tm = min(256, _round_up(B, 8))
    tn = min(512, _round_up(out_f, 128))
    tk = min(512, _round_up(in_f, 128))

    # Pad every dim to an exact multiple of its tile (zero padding on K is
    # exact; padded M rows / N cols are sliced off afterwards).
    pB, pN, pK = _round_up(B, tm), _round_up(out_f, tn), _round_up(in_f, tk)

    xp = jnp.zeros((pB, pK), cdt).at[:B, :in_f].set(x.astype(cdt))
    wp = jnp.zeros((pN, pK), cdt).at[:out_f, :in_f].set(weight.astype(cdt))
    mp = jnp.zeros((pN, pK), jnp.int8).at[:out_f, :in_f].set(mask.astype(jnp.int8))
    bp = jnp.zeros((1, pN), jnp.float32).at[0, :out_f].set(bias.astype(jnp.float32))

    grid = (pB // tm, pN // tn, pK // tk)

    out_padded = pl.pallas_call(
        masked_linear_kernel,
        out_shape=jax.ShapeDtypeStruct((pB, pN), out_dtype),
        grid_spec=pltpu.PrefetchScalarGridSpec(
            num_scalar_prefetch=0,
            grid=grid,
            in_specs=[
                pl.BlockSpec((tm, tk), lambda i, j, k: (i, k)),   # x
                pl.BlockSpec((tn, tk), lambda i, j, k: (j, k)),   # weight
                pl.BlockSpec((tn, tk), lambda i, j, k: (j, k)),   # mask (int8)
                pl.BlockSpec((1, tn), lambda i, j, k: (0, j)),    # bias
            ],
            out_specs=pl.BlockSpec((tm, tn), lambda i, j, k: (i, j)),
            scratch_shapes=[pltpu.VMEM((tm, tn), jnp.float32)],
        ),
        compiler_params=pltpu.CompilerParams(
            # M/N parallel -> v7x's 2 TensorCores split output tiles;
            # K arbitrary -> sequential reduction into the resident accumulator.
            dimension_semantics=("parallel", "parallel", "arbitrary"),
            vmem_limit_bytes=48 * 1024 * 1024,  # headroom under v7x's 64 MiB
        ),
        # If profiling shows the weight/mask DMA exposed at small tm, bump
        # pipeline_mode=pl.Buffered(3) on the weight/mask BlockSpecs.
    )(xp, wp, mp, bp)

    return out_padded[:B, :out_f]


if __name__ == "__main__":
    # Small shapes consistent with the module's forward.
    B, in_features, out_features = 8, 32, 16

    key = jax.random.PRNGKey(0)
    kx, kw, kb, km = jax.random.split(key, 4)

    # Deterministic init mirroring MaskedLinear.init_weights (uniform(-stdv, stdv)).
    stdv = 1.0 / math.sqrt(in_features)
    x = jax.random.normal(kx, (B, in_features), dtype=jnp.float32)
    weight = jax.random.uniform(kw, (out_features, in_features),
                                minval=-stdv, maxval=stdv, dtype=jnp.float32)
    bias = jax.random.uniform(kb, (out_features,),
                              minval=-stdv, maxval=stdv, dtype=jnp.float32)
    # Mask: mimic a pruned state (0/1 entries); default module state is all-ones,
    # a random mask exercises the masking path too.
    mask = (jax.random.uniform(km, (out_features, in_features)) > 0.3).astype(jnp.float32)

    ref = x @ (weight * mask).T + bias

    # f32 compute path (exact-ish check).
    out = masked_linear(x, weight, mask, bias)
    out = jax.block_until_ready(out)
    assert out.shape == (B, out_features)
    assert jnp.allclose(out, ref, atol=1e-5, rtol=1e-5)

    # bf16 compute path (weight-bandwidth optimization; f32 accumulation kept).
    out_bf16 = masked_linear(x, weight, mask, bias, compute_dtype=jnp.bfloat16)
    out_bf16 = jax.block_until_ready(out_bf16)
    assert jnp.allclose(out_bf16.astype(jnp.float32), ref, atol=3e-2, rtol=3e-2)

    print("KERNEL_OK")
</pallas_src>

<mosaic_0001>
module attributes {stable_mosaic.version = 11 : i64} {
  func.func @masked_linear_kernel(%arg0: i32, %arg1: i32, %arg2: i32, %arg3: memref<8x128xf32, #tpu.memory_space<vmem>>, %arg4: memref<128x128xf32, #tpu.memory_space<vmem>>, %arg5: memref<128x128xi8, #tpu.memory_space<vmem>>, %arg6: memref<1x128xf32, #tpu.memory_space<vmem>>, %arg7: memref<8x128xf32, #tpu.memory_space<vmem>>, %arg8: memref<8x128xf32, #tpu.memory_space<vmem>>) attributes {dimension_semantics = [#tpu.dimension_semantics<parallel>, #tpu.dimension_semantics<parallel>, #tpu.dimension_semantics<arbitrary>], iteration_bounds = array<i64: 1, 1, 1>, scalar_prefetch = 0 : i64, scratch_operands = 1 : i64, tpu.core_type = #tpu.core_type<tc>, window_params = [{transform_indices = @transform_0, window_bounds = array<i64: 8, 128>}, {transform_indices = @transform_1, window_bounds = array<i64: 128, 128>}, {transform_indices = @transform_2, window_bounds = array<i64: 128, 128>}, {transform_indices = @transform_3, window_bounds = array<i64: 1, 128>}, {transform_indices = @transform_4, window_bounds = array<i64: 8, 128>}]} {
    %c0_i32 = arith.constant 0 : i32
    %0 = arith.cmpi eq, %arg2, %c0_i32 : i32
    %1 = arith.extui %0 : i1 to i32
    %c0_i32_0 = arith.constant 0 : i32
    %2 = arith.cmpi ne, %1, %c0_i32_0 : i32
    scf.if %2 {
      %cst_12 = arith.constant 0.000000e+00 : f32
      %15 = vector.broadcast %cst_12 : f32 to vector<8x128xf32>
      %c0_13 = arith.constant 0 : index
      %c0_14 = arith.constant 0 : index
      %16 = vector.load %arg8[%c0_13, %c0_14] : memref<8x128xf32, #tpu.memory_space<vmem>>, vector<8x128xf32>
      tpu.vector_store %arg8[%c0_13, %c0_14], %15 {strides = array<i32>} : memref<8x128xf32, #tpu.memory_space<vmem>>, vector<8x128xf32>,
    } else {
    }
    %c0 = arith.constant 0 : index
    %c0_1 = arith.constant 0 : index
    %3 = vector.load %arg4[%c0, %c0_1] : memref<128x128xf32, #tpu.memory_space<vmem>>, vector<128x128xf32>
    %c0_2 = arith.constant 0 : index
    %c0_3 = arith.constant 0 : index
    %4 = vector.load %arg5[%c0_2, %c0_3] : memref<128x128xi8, #tpu.memory_space<vmem>>, vector<128x128xi8>
    %5 = arith.sitofp %4 : vector<128x128xi8> to vector<128x128xf32>
    %6 = arith.mulf %3, %5 : vector<128x128xf32>
    %c0_4 = arith.constant 0 : index
    %c0_5 = arith.constant 0 : index
    %7 = vector.load %arg8[%c0_4, %c0_5] : memref<8x128xf32, #tpu.memory_space<vmem>>, vector<8x128xf32>
    %c0_6 = arith.constant 0 : index
    %c0_7 = arith.constant 0 : index
    %8 = vector.load %arg3[%c0_6, %c0_7] : memref<8x128xf32, #tpu.memory_space<vmem>>, vector<8x128xf32>
    %cst = arith.constant dense<0.000000e+00> : vector<8x128xf32>
    %9 = tpu.matmul %8, %6, %cst {dimension_numbers = #tpu.dot_dimension_numbers<[1], [1], [0], [0], [0, 0, 1, 0], [], []>} : vector<8x128xf32>, vector<128x128xf32>, vector<8x128xf32> -> vector<8x128xf32>
    %10 = arith.addf %7, %9 : vector<8x128xf32>
    %c0_8 = arith.constant 0 : index
    %c0_9 = arith.constant 0 : index
    %11 = vector.load %arg8[%c0_8, %c0_9] : memref<8x128xf32, #tpu.memory_space<vmem>>, vector<8x128xf32>
    tpu.vector_store %arg8[%c0_8, %c0_9], %10 {strides = array<i32>} : memref<8x128xf32, #tpu.memory_space<vmem>>, vector<8x128xf32>,
    %c0_i32_10 = arith.constant 0 : i32
    %12 = arith.cmpi eq, %arg2, %c0_i32_10 : i32
    %13 = arith.extui %12 : i1 to i32
    %c0_i32_11 = arith.constant 0 : i32
    %14 = arith.cmpi ne, %13, %c0_i32_11 : i32
    scf.if %14 {
      %c0_12 = arith.constant 0 : index
      %c0_13 = arith.constant 0 : index
      %15 = vector.load %arg8[%c0_12, %c0_13] : memref<8x128xf32, #tpu.memory_space<vmem>>, vector<8x128xf32>
      %c0_14 = arith.constant 0 : index
      %c0_15 = arith.constant 0 : index
      %16 = vector.load %arg6[%c0_14, %c0_15] : memref<1x128xf32, #tpu.memory_space<vmem>>, vector<1x128xf32>
      %17 = vector.broadcast %16 : vector<1x128xf32> to vector<8x128xf32>
      %18 = arith.addf %15, %17 : vector<8x128xf32>
      %c0_16 = arith.constant 0 : index
      %c0_17 = arith.constant 0 : index
      %19 = vector.load %arg7[%c0_16, %c0_17] : memref<8x128xf32, #tpu.memory_space<vmem>>, vector<8x128xf32>
      tpu.vector_store %arg7[%c0_16, %c0_17], %18 {strides = array<i32>} : memref<8x128xf32, #tpu.memory_space<vmem>>, vector<8x128xf32>,
    } else {
    }
    return
  }
  func.func @transform_0(%arg0: i32, %arg1: i32, %arg2: i32) -> (i32, i32) {
    %c0_i32 = arith.constant 0 : i32
    return %arg0, %arg2 : i32, i32
  }
  func.func @transform_1(%arg0: i32, %arg1: i32, %arg2: i32) -> (i32, i32) {
    %c0_i32 = arith.constant 0 : i32
    return %arg1, %arg2 : i32, i32
  }
  func.func @transform_2(%arg0: i32, %arg1: i32, %arg2: i32) -> (i32, i32) {
    %c0_i32 = arith.constant 0 : i32
    return %arg1, %arg2 : i32, i32
  }
  func.func @transform_3(%arg0: i32, %arg1: i32, %arg2: i32) -> (i32, i32) {
    %c0_i32 = arith.constant 0 : i32
    %c0_i32_0 = arith.constant 0 : i32
    return %c0_i32, %arg1 : i32, i32
  }
  func.func @transform_4(%arg0: i32, %arg1: i32, %arg2: i32) -> (i32, i32) {
    %c0_i32 = arith.constant 0 : i32
    return %arg0, %arg1 : i32, i32
  }
}

</mosaic_0001>

<llo_original>
// kernel: masked_linear.1
$region0: #{masked_linear.1}
  #allocation0 [shape = 'u32[]', space=smem, size = 0x4, offset = 0x4, fixed_abs, tag = 'smem constant byte address 0x4 - core index']
  #allocation1 [shape = 'u32[144,128]{1,0:T(1,128)}', space=vmem, size = 0x12000, scoped, tag = 'internal scratch']
  #allocation2 [shape = 'f32[8,128]{1,0:T(8,128)}', space=vmem, size = 0x1000, scoped, tag = 'scratch operand']
  %s0 = inlined_call_operand.vmem [shape: f32[8,128], index: 0, kind: input, shape index: {}]
  %s1 = inlined_call_operand.vmem [shape: f32[128,128], index: 1, kind: input, shape index: {}]
  %s2 = inlined_call_operand.vmem [shape: s8[128,128], index: 2, kind: input, shape index: {}]
  %s3 = inlined_call_operand.vmem [shape: f32[1,128], index: 3, kind: input, shape index: {}]
  %s4 = inlined_call_operand.hbm [shape: f32[8,128], index: 4, kind: output, shape index: {}]
  %s5 = sld [smem:[#allocation0]]
  $region34: #{masked_linear.1} parent=0
    _
  %s7 = ssub.s32 1, %s5
  %s8 = scalar_select 0, %s7, %s5
  $region1: #{masked_linear.1} parent=0
    #allocation3 [shape = 'u8[4096]{0}', space=vmem, size = 0x1000, scoped, tag = 'output window, operand 0, single buffered']
    #allocation4 [shape = 's32[1]{0}', space=sflag, size = 0x4, scoped, tag = 'scoped memory for masked_linear.1']
    %9 = vsyncpa [#allocation4], 0
    // Predicated region
    $region2: #{masked_linear.1} parent=1 // pred_check
      _
    $region3: #{masked_linear.1} parent=1 // pred_check_branch
      %11 = sbr.rel (0) target = $region5
    $region4: #{masked_linear.1} parent=1 // pred_region
      _
    $region5: #{masked_linear.1} parent=1 // pred_fallthru
      _
    // Predicated region
    $region6: #{masked_linear.1} parent=1 // pred_check
      _
    $region7: #{masked_linear.1} parent=1 // pred_check_branch
      %13 = sbr.rel (0) target = $region9
    $region8: #{masked_linear.1} parent=1 // pred_region
      _
    $region9: #{masked_linear.1} parent=1 // pred_fallthru
      _
    // Predicated region
    $region10: #{masked_linear.1} parent=1 // pred_check
      _
    $region11: #{masked_linear.1} parent=1 // pred_check_branch
      %15 = sbr.rel (0) target = $region13
    $region12: #{masked_linear.1} parent=1 // pred_region
      _
    $region13: #{masked_linear.1} parent=1 // pred_fallthru
      _
    // Predicated region
    $region14: #{masked_linear.1} parent=1 // pred_check
      _
    $region15: #{masked_linear.1} parent=1 // pred_check_branch
      %17 = sbr.rel (0) target = $region17
    $region16: #{masked_linear.1} parent=1 // pred_region
      _
    $region17: #{masked_linear.1} parent=1 // pred_fallthru
      _
    %p18 = scmp.eq.s32.totalorder 0, 0
    // Predicated region
    $region18: #{masked_linear.1} parent=1 // pred_check
      %p19 = pneg %p18
    $region19: #{masked_linear.1} parent=1 // pred_check_branch
      %21 = sbr.rel (%p19) target = $region21
    $region20: #{masked_linear.1} parent=1 // pred_region
      %22 = vst [vmem:[#allocation2] sm:$0xff] 0.0
    $region21: #{masked_linear.1} parent=1 // pred_fallthru
      _
    %v23 = vld [vmem:[%s1] sm:$0xff]
    %v24 = vld [vmem:[%s1 + $0x8] sm:$0xff]
    %v25 = vld [vmem:[%s1 + $0x10] sm:$0xff]
    %v26 = vld [vmem:[%s1 + $0x18] sm:$0xff]
    %v27 = vld [vmem:[%s1 + $0x20] sm:$0xff]
    %v28 = vld [vmem:[%s1 + $0x28] sm:$0xff]
    %v29 = vld [vmem:[%s1 + $0x30] sm:$0xff]
    %v30 = vld [vmem:[%s1 + $0x38] sm:$0xff]
    %v31 = vld [vmem:[%s1 + $0x40] sm:$0xff]
    %v32 = vld [vmem:[%s1 + $0x48] sm:$0xff]
    %v33 = vld [vmem:[%s1 + $0x50] sm:$0xff]
    %v34 = vld [vmem:[%s1 + $0x58] sm:$0xff]
    %v35 = vld [vmem:[%s1 + $0x60] sm:$0xff]
    %v36 = vld [vmem:[%s1 + $0x68] sm:$0xff]
    %v37 = vld [vmem:[%s1 + $0x70] sm:$0xff]
    %v38 = vld [vmem:[%s1 + $0x78] sm:$0xff]
    %v39 = vld [vmem:[%s2] sm:$0xff]
    %v40 = vld [vmem:[%s2 + $0x8] sm:$0xff]
    %v41 = vld [vmem:[%s2 + $0x10] sm:$0xff]
    %v42 = vld [vmem:[%s2 + $0x18] sm:$0xff]
    %v43 = vunpack.c.0.s8 %v39
    %v44 = vunpack.c.1.s8 %v39
    %v45 = vunpack.c.2.s8 %v39
    %v46 = vunpack.c.3.s8 %v39
    %v47 = vunpack.c.0.s8 %v40
    %v48 = vunpack.c.1.s8 %v40
    %v49 = vunpack.c.2.s8 %v40
    %v50 = vunpack.c.3.s8 %v40
    %v51 = vunpack.c.0.s8 %v41
    %v52 = vunpack.c.1.s8 %v41
    %v53 = vunpack.c.2.s8 %v41
    %v54 = vunpack.c.3.s8 %v41
    %v55 = vunpack.c.0.s8 %v42
    %v56 = vunpack.c.1.s8 %v42
    %v57 = vunpack.c.2.s8 %v42
    %v58 = vunpack.c.3.s8 %v42
    %v59 = vcvt.s32.f32 %v43
    %v60 = vcvt.s32.f32 %v44
    %v61 = vcvt.s32.f32 %v45
    %v62 = vcvt.s32.f32 %v46
    %v63 = vcvt.s32.f32 %v47
    %v64 = vcvt.s32.f32 %v48
    %v65 = vcvt.s32.f32 %v49
    %v66 = vcvt.s32.f32 %v50
    %v67 = vcvt.s32.f32 %v51
    %v68 = vcvt.s32.f32 %v52
    %v69 = vcvt.s32.f32 %v53
    %v70 = vcvt.s32.f32 %v54
    %v71 = vcvt.s32.f32 %v55
    %v72 = vcvt.s32.f32 %v56
    %v73 = vcvt.s32.f32 %v57
    %v74 = vcvt.s32.f32 %v58
    %v75 = vmul.f32 %v23, %v59
    %v76 = vmul.f32 %v24, %v60
    %v77 = vmul.f32 %v25, %v61
    %v78 = vmul.f32 %v26, %v62
    %v79 = vmul.f32 %v27, %v63
    %v80 = vmul.f32 %v28, %v64
    %v81 = vmul.f32 %v29, %v65
    %v82 = vmul.f32 %v30, %v66
    %v83 = vmul.f32 %v31, %v67
    %v84 = vmul.f32 %v32, %v68
    %v85 = vmul.f32 %v33, %v69
    %v86 = vmul.f32 %v34, %v70
    %v87 = vmul.f32 %v35, %v71
    %v88 = vmul.f32 %v36, %v72
    %v89 = vmul.f32 %v37, %v73
    %v90 = vmul.f32 %v38, %v74
    %v91 = vld [vmem:[#allocation2] sm:$0xff]
    %v92 = vld [vmem:[%s0] sm:$0xff]
    %93 = vmatprep.subr.mxu0 0.0
    %94 = vmatpush1.xpose.msra.mxu0 %v90
    %95 = vmatprep.subr.mxu0 0.0
    %96 = vmatpush1.xpose.msra.mxu0 %v89
    %97 = vmatprep.subr.mxu0 0.0
    %98 = vmatpush1.xpose.msra.mxu0 %v88
    %99 = vmatprep.subr.mxu0 0.0
    %100 = vmatpush1.xpose.msra.mxu0 %v87
    %101 = vmatprep.subr.mxu0 0.0
    %102 = vmatpush1.xpose.msra.mxu0 %v86
    %103 = vmatprep.subr.mxu0 0.0
    %104 = vmatpush1.xpose.msra.mxu0 %v85
    %105 = vmatprep.subr.mxu0 0.0
    %106 = vmatpush1.xpose.msra.mxu0 %v84
    %107 = vmatprep.subr.mxu0 0.0
    %108 = vmatpush1.xpose.msra.mxu0 %v83
    %109 = vmatprep.subr.mxu0 0.0
    %110 = vmatpush1.xpose.msra.mxu0 %v82
    %111 = vmatprep.subr.mxu0 0.0
    %112 = vmatpush1.xpose.msra.mxu0 %v81
    %113 = vmatprep.subr.mxu0 0.0
    %114 = vmatpush1.xpose.msra.mxu0 %v80
    %115 = vmatprep.subr.mxu0 0.0
    %116 = vmatpush1.xpose.msra.mxu0 %v79
    %117 = vmatprep.subr.mxu0 0.0
    %118 = vmatpush1.xpose.msra.mxu0 %v78
    %119 = vmatprep.subr.mxu0 0.0
    %120 = vmatpush1.xpose.msra.mxu0 %v77
    %121 = vmatprep.subr.mxu0 0.0
    %122 = vmatpush1.xpose.msra.mxu0 %v76
    %123 = vmatprep.subr.mxu0 0.0
    %124 = vmatpush1.xpose.msra.mxu0 %v75
    %125 = vmatprep.subr.mxu0 0.0
    %126 = vmatpush2.xpose.msra.mxu0 0.0
    %127 = vmatprep.subr.mxu0 0.0
    %128 = vmatpush2.xpose.msra.mxu0 0.0
    %129 = vmatprep.subr.mxu0 0.0
    %130 = vmatpush2.xpose.msra.mxu0 0.0
    %131 = vmatprep.subr.mxu0 0.0
    %132 = vmatpush2.xpose.msra.mxu0 0.0
    %133 = vmatprep.subr.mxu0 0.0
    %134 = vmatpush2.xpose.msra.mxu0 0.0
    %135 = vmatprep.subr.mxu0 0.0
    %136 = vmatpush2.xpose.msra.mxu0 0.0
    %137 = vmatprep.subr.mxu0 0.0
    %138 = vmatpush2.xpose.msra.mxu0 0.0
    %139 = vmatprep.subr.mxu0 0.0
    %140 = vmatpush2.xpose.msra.mxu0 0.0
    %141 = vmatprep.subr.mxu0 0.0
    %142 = vmatpush2.xpose.msra.mxu0 0.0
    %143 = vmatprep.subr.mxu0 0.0
    %144 = vmatpush2.xpose.msra.mxu0 0.0
    %145 = vmatprep.subr.mxu0 0.0
    %146 = vmatpush2.xpose.msra.mxu0 0.0
    %147 = vmatprep.subr.mxu0 0.0
    %148 = vmatpush2.xpose.msra.mxu0 0.0
    %149 = vmatprep.subr.mxu0 0.0
    %150 = vmatpush2.xpose.msra.mxu0 0.0
    %151 = vmatprep.subr.mxu0 0.0
    %152 = vmatpush2.xpose.msra.mxu0 0.0
    %153 = vmatprep.subr.mxu0 0.0
    %154 = vmatpush2.xpose.msra.mxu0 0.0
    %155 = vmatprep.subr.mxu0 0.0
    %156 = vmatpush2.xpose.msra.mxu0 0.0
    %157 = vmatprep.mubr.f32.mxu0 0.0
    %158 = vmatmul.mubr.f32.gmra.mxu0 %v92
    %v159 = vpop.f32.mrf.mxu0
    %v160 = vadd.f32 0.0, %v159
    %v161 = vpop.f32.mrf.mxu0
    %162 = vdwg.mxu0
    %v163 = vadd.f32 %v91, %v160
    %164 = vst [vmem:[#allocation2] sm:$0xff] %v163
    // Predicated region
    $region22: #{masked_linear.1} parent=1 // pred_check
      %p165 = pneg %p18
    $region23: #{masked_linear.1} parent=1 // pred_check_branch
      %167 = sbr.rel (%p165) target = $region25
    $region24: #{masked_linear.1} parent=1 // pred_region
      %v168 = vld [vmem:[#allocation2] sm:$0xff]
      %v169 = vld [vmem:[%s3] sm:$0x1]
      %v171 = vlaneseq
      %v172 = vshrl.u32 %v171, 7
      %v173 = vsub.s32 0, %v172
      %v174 = vrot.slane %v169, %v173
      %v176 = vadd.f32 %v168, %v174
      %177 = vst [vmem:[#allocation3] sm:$0xff] %v176
    $region25: #{masked_linear.1} parent=1 // pred_fallthru
      _
    // Predicated region
    $region26: #{masked_linear.1} parent=1 // pred_check
      _
    $region27: #{masked_linear.1} parent=1 // pred_check_branch
      %179 = sbr.rel (0) target = $region29
    $region28: #{masked_linear.1} parent=1 // pred_region
      %s181 = ssub.s32 128, 128
      %182 = vsyncadd [#allocation4], %s181
      %s184 = sshll.u32 [#allocation3], 4
      %s185 = int_to_ptr.vmem [resolvable:$true] %s184
      %187 = dma.vmem_to_hbm [thread:$0]  %s185, 128, %s4, [#allocation4]
    $region29: #{masked_linear.1} parent=1 // pred_fallthru
      _
    // Predicated region
    $region30: #{masked_linear.1} parent=1 // pred_check
      _
    $region31: #{masked_linear.1} parent=1 // pred_check_branch
      %189 = sbr.rel (0) target = $region33
    $region32: #{masked_linear.1} parent=1 // pred_region
      %190 = dma.done [#allocation4], 128
    $region33: #{masked_linear.1} parent=1 // pred_fallthru
      _
    %191 = vsyncpa [#allocation4], 1

</llo_original>
